<compile_context>
chip_gen: v7x
topology: tpu7x:2x2x1
jax: 0.10.0
libtpu: 0.0.40
codegen_flags: <defaults>
</compile_context>

<pallas_src>
import jax
import jax.numpy as jnp
from jax.experimental import pallas as pl
from jax.experimental.pallas import tpu as pltpu

_VMEM_LIMIT_BYTES = 32 << 20      # explicit scoped-VMEM limit (safe on v5e/v6e/v7x)
_TILE_VMEM_BUDGET = 24 << 20      # budget used to size the batch tile (leaves headroom)
_SINGLE_PATH_MAX_BYTES = 4 << 20  # x + W + out resident below this -> grid-less path
_MAX_BATCH_TILE = 8192            # review target: 4096-8192 rows per grid step


def _round_up(n, m):
    return ((n + m - 1) // m) * m


def _round_down_to_multiple(n, m):
    return max((n // m) * m, m)


def _linear_softmax_kernel(x_ref, wt_ref, o_ref):
    """One batch tile: MXU matmul + numerically-stable exact softmax."""
    x = x_ref[...]                         # (B_tile, D_in) f32
    wt = wt_ref[...]                       # (D_in, D_out) f32 (pre-transposed in wrapper)
    logits = jnp.dot(x, wt, preferred_element_type=jnp.float32)   # (B_tile, D_out)
    m = jnp.max(logits, axis=-1, keepdims=True)
    e = jnp.exp(logits - m)
    denom = jnp.sum(e, axis=-1, keepdims=True)
    # Exact divide: rows sum to 1 to f32 precision (kernel is memory-bound, this is free).
    o_ref[...] = (e / denom).astype(o_ref.dtype)


def _cost_estimate(B, d_in, d_out):
    return pl.CostEstimate(
        flops=2 * B * d_in * d_out,
        transcendentals=B * d_out,
        bytes_accessed=4 * (B * d_in + d_in * d_out + B * d_out),
    )


def _forward_single(x, wt):
    """Grid-less call: everything resident in VMEM, zero per-step pipeline overhead."""
    B, d_in = x.shape
    d_out = wt.shape[1]
    return pl.pallas_call(
        _linear_softmax_kernel,
        out_shape=jax.ShapeDtypeStruct((B, d_out), jnp.float32),
        in_specs=[
            pl.BlockSpec(memory_space=pltpu.MemorySpace.VMEM),
            pl.BlockSpec(memory_space=pltpu.MemorySpace.VMEM),
        ],
        out_specs=pl.BlockSpec(memory_space=pltpu.MemorySpace.VMEM),
        cost_estimate=_cost_estimate(B, d_in, d_out),
    )(x, wt)


def _pick_batch_tile(B, d_in, d_out):
    """Derive the batch tile from a VMEM byte budget (x + out double-buffered, f32),
    cap at 8192 rows, and keep >= 2 grid steps so both v7x TensorCores get work."""
    bytes_per_row = 2 * 4 * (d_in + d_out)            # double-buffered x + out, f32
    budget_rows = max(_TILE_VMEM_BUDGET // bytes_per_row, 8)
    half_batch = _round_up(pl.cdiv(B, 2), 8)          # >= 2 grid steps
    tile = min(_MAX_BATCH_TILE, budget_rows, half_batch, _round_up(B, 8))
    return _round_down_to_multiple(tile, 8)


def _forward_tiled(x, wt, batch_tile):
    """Batch-tiled path: x/out double-buffered, W resident as a single buffer,
    batch axis marked parallel for megacore sharding."""
    B, d_in = x.shape
    d_out = wt.shape[1]
    grid = (pl.cdiv(B, batch_tile),)
    return pl.pallas_call(
        _linear_softmax_kernel,
        out_shape=jax.ShapeDtypeStruct((B, d_out), jnp.float32),
        grid=grid,
        in_specs=[
            pl.BlockSpec((batch_tile, d_in), lambda i: (i, 0)),
            # W never changes across the grid -> one buffer is enough.
            pl.BlockSpec((d_in, d_out), lambda i: (0, 0),
                         pipeline_mode=pl.Buffered(buffer_count=1)),
        ],
        out_specs=pl.BlockSpec((batch_tile, d_out), lambda i: (i, 0)),
        compiler_params=pltpu.CompilerParams(
            dimension_semantics=("parallel",),
            vmem_limit_bytes=_VMEM_LIMIT_BYTES,
        ),
        cost_estimate=_cost_estimate(B, d_in, d_out),
    )(x, wt)


def network_forward(x, w):
    """x: (B, D_in) f32, w: (D_out, D_in) f32 (nn.Linear layout) -> (B, D_out) f32."""
    B, d_in = x.shape
    d_out = w.shape[0]
    # One cheap wrapper-side transpose: kernel sees the canonical (M,K)x(K,N) matmul.
    wt = jnp.transpose(w)                              # (D_in, D_out)
    resident_bytes = 4 * (B * d_in + d_in * d_out + B * d_out)
    if resident_bytes <= _SINGLE_PATH_MAX_BYTES:
        return _forward_single(x, wt)
    return _forward_tiled(x, wt, _pick_batch_tile(B, d_in, d_out))


if __name__ == "__main__":
    # Small shapes consistent with the module: Linear(input_layer=32, output_layer=16).
    batch, input_layer, output_layer = 8, 32, 16

    key = jax.random.PRNGKey(0)
    kx, kw = jax.random.split(key)

    x = jax.random.normal(kx, (batch, input_layer), dtype=jnp.float32)
    # Deterministic init mimicking nn.Linear default (uniform in +-1/sqrt(fan_in)).
    bound = 1.0 / (input_layer ** 0.5)
    w = jax.random.uniform(
        kw, (output_layer, input_layer), dtype=jnp.float32, minval=-bound, maxval=bound
    )

    # Small batch -> grid-less fully-resident path.
    y = network_forward(x, w)
    jax.block_until_ready(y)

    ref = jax.nn.softmax(x @ w.T, axis=1)
    assert y.shape == (batch, output_layer)
    assert jnp.allclose(y, ref, atol=1e-5, rtol=1e-5)
    assert jnp.allclose(jnp.sum(y, axis=1), jnp.ones(batch), atol=1e-5)

    # Larger batch -> tiled, batch-parallel path (>= 2 grid steps).
    big_batch = 16384
    xb = jax.random.normal(jax.random.PRNGKey(1), (big_batch, input_layer), dtype=jnp.float32)
    yb = network_forward(xb, w)
    jax.block_until_ready(yb)

    refb = jax.nn.softmax(xb @ w.T, axis=1)
    assert yb.shape == (big_batch, output_layer)
    assert jnp.allclose(yb, refb, atol=1e-5, rtol=1e-5)
    assert jnp.allclose(jnp.sum(yb, axis=1), jnp.ones(big_batch), atol=1e-5)

    print("KERNEL_OK")
</pallas_src>

<mosaic_0001>
module attributes {stable_mosaic.version = 11 : i64} {
  func.func @_linear_softmax_kernel(%arg0: memref<8x32xf32, #tpu.memory_space<vmem>>, %arg1: memref<32x16xf32, #tpu.memory_space<vmem>>, %arg2: memref<8x16xf32, #tpu.memory_space<vmem>>) attributes {dimension_semantics = [], scalar_prefetch = 0 : i64, scratch_operands = 0 : i64, tpu.core_type = #tpu.core_type<tc>} {
    %c0 = arith.constant 0 : index
    %c0_0 = arith.constant 0 : index
    %0 = vector.load %arg0[%c0, %c0_0] : memref<8x32xf32, #tpu.memory_space<vmem>>, vector<8x32xf32>
    %c0_1 = arith.constant 0 : index
    %c0_2 = arith.constant 0 : index
    %1 = vector.load %arg1[%c0_1, %c0_2] : memref<32x16xf32, #tpu.memory_space<vmem>>, vector<32x16xf32>
    %cst = arith.constant dense<0.000000e+00> : vector<8x16xf32>
    %2 = tpu.matmul %0, %1, %cst {dimension_numbers = #tpu.dot_dimension_numbers<[1], [0], [0], [1], [0, 0, 1, 1], [], []>} : vector<8x32xf32>, vector<32x16xf32>, vector<8x16xf32> -> vector<8x16xf32>
    %cst_3 = arith.constant dense<0xFF800000> : vector<8xf32>
    %3 = vector.multi_reduction <maximumf>, %2, %cst_3 [1] : vector<8x16xf32> to vector<8xf32>
    %4 = vector.shape_cast %3 : vector<8xf32> to vector<8x1xf32>
    %5 = vector.broadcast %4 : vector<8x1xf32> to vector<8x16xf32>
    %6 = arith.subf %2, %5 : vector<8x16xf32>
    %7 = math.exp %6 : vector<8x16xf32>
    %cst_4 = arith.constant dense<0.000000e+00> : vector<8xf32>
    %8 = vector.multi_reduction <add>, %7, %cst_4 [1] : vector<8x16xf32> to vector<8xf32>
    %9 = vector.shape_cast %8 : vector<8xf32> to vector<8x1xf32>
    %10 = vector.broadcast %9 : vector<8x1xf32> to vector<8x16xf32>
    %11 = arith.divf %7, %10 : vector<8x16xf32>
    %c0_5 = arith.constant 0 : index
    %c0_6 = arith.constant 0 : index
    %12 = vector.load %arg2[%c0_5, %c0_6] : memref<8x16xf32, #tpu.memory_space<vmem>>, vector<8x16xf32>
    tpu.vector_store %arg2[%c0_5, %c0_6], %11 {strides = array<i32>} : memref<8x16xf32, #tpu.memory_space<vmem>>, vector<8x16xf32>,
    return
  }
}

</mosaic_0001>

<llo_original>
// kernel: tpu_custom_call.1
$region0: #{tpu_custom_call.1}
  #allocation0 [shape = 'u32[]', space=smem, size = 0x4, offset = 0x4, fixed_abs, tag = 'smem constant byte address 0x4 - core index']
  #allocation1 [shape = 'u32[144,128]{1,0:T(1,128)}', space=vmem, size = 0x12000, scoped, tag = 'internal scratch']
  %s0 = inlined_call_operand.vmem [shape: f32[8,32], index: 0, kind: input, shape index: {}]
  %s1 = inlined_call_operand.vmem [shape: f32[32,16], index: 1, kind: input, shape index: {}]
  %s2 = inlined_call_operand.hbm [shape: f32[8,16], index: 2, kind: output, shape index: {}]
  %s3 = sld [smem:[#allocation0]]
  $region18: #{tpu_custom_call.1} parent=0
    _
  %s5 = ssub.s32 1, %s3
  %s6 = scalar_select 0, %s5, %s3
  $region1: #{tpu_custom_call.1} parent=0
    #allocation2 [shape = 'u8[4096]{0}', space=vmem, size = 0x1000, scoped, tag = 'output window, operand 0, single buffered']
    #allocation3 [shape = 's32[1]{0}', space=sflag, size = 0x4, scoped, tag = 'scoped memory for tpu_custom_call.1']
    %7 = vsyncpa [#allocation3], 0
    // Predicated region
    $region2: #{tpu_custom_call.1} parent=1 // pred_check
      _
    $region3: #{tpu_custom_call.1} parent=1 // pred_check_branch
      %9 = sbr.rel (0) target = $region5
    $region4: #{tpu_custom_call.1} parent=1 // pred_region
      _
    $region5: #{tpu_custom_call.1} parent=1 // pred_fallthru
      _
    // Predicated region
    $region6: #{tpu_custom_call.1} parent=1 // pred_check
      _
    $region7: #{tpu_custom_call.1} parent=1 // pred_check_branch
      %11 = sbr.rel (0) target = $region9
    $region8: #{tpu_custom_call.1} parent=1 // pred_region
      _
    $region9: #{tpu_custom_call.1} parent=1 // pred_fallthru
      _
    %v12 = vld [vmem:[%s0] sm:$0xff]
    %v13 = vld [vmem:[%s1] sm:$0xff]
    %v14 = vld [vmem:[%s1 + $0x8] sm:$0xff]
    %v15 = vld [vmem:[%s1 + $0x10] sm:$0xff]
    %v16 = vld [vmem:[%s1 + $0x18] sm:$0xff]
    %vm17 = vcmask 261120
    %v19 = vsel %vm17, %v12, 0
    %21 = vmatprep.subr.mxu0 0.0
    %22 = vmatpush1.msra.mxu0 %v13
    %23 = vmatprep.subr.mxu0 0.0
    %24 = vmatpush1.msra.mxu0 %v14
    %25 = vmatprep.subr.mxu0 0.0
    %26 = vmatpush1.msra.mxu0 %v15
    %27 = vmatprep.subr.mxu0 0.0
    %28 = vmatpush1.msra.mxu0 %v16
    %29 = vmatprep.subr.mxu0 0.0
    %30 = vmatpush1.msra.mxu0 0.0
    %31 = vmatprep.subr.mxu0 0.0
    %32 = vmatpush1.msra.mxu0 0.0
    %33 = vmatprep.subr.mxu0 0.0
    %34 = vmatpush1.msra.mxu0 0.0
    %35 = vmatprep.subr.mxu0 0.0
    %36 = vmatpush1.msra.mxu0 0.0
    %37 = vmatprep.subr.mxu0 0.0
    %38 = vmatpush1.msra.mxu0 0.0
    %39 = vmatprep.subr.mxu0 0.0
    %40 = vmatpush1.msra.mxu0 0.0
    %41 = vmatprep.subr.mxu0 0.0
    %42 = vmatpush1.msra.mxu0 0.0
    %43 = vmatprep.subr.mxu0 0.0
    %44 = vmatpush1.msra.mxu0 0.0
    %45 = vmatprep.subr.mxu0 0.0
    %46 = vmatpush1.msra.mxu0 0.0
    %47 = vmatprep.subr.mxu0 0.0
    %48 = vmatpush1.msra.mxu0 0.0
    %49 = vmatprep.subr.mxu0 0.0
    %50 = vmatpush1.msra.mxu0 0.0
    %51 = vmatprep.subr.mxu0 0.0
    %52 = vmatpush1.msra.mxu0 0.0
    %53 = vmatprep.subr.mxu0 0.0
    %54 = vmatpush1.msra.mxu0 0.0
    %55 = vmatprep.subr.mxu0 0.0
    %56 = vmatpush1.msra.mxu0 0.0
    %57 = vmatprep.subr.mxu0 0.0
    %58 = vmatpush1.msra.mxu0 0.0
    %59 = vmatprep.subr.mxu0 0.0
    %60 = vmatpush1.msra.mxu0 0.0
    %61 = vmatprep.subr.mxu0 0.0
    %62 = vmatpush1.msra.mxu0 0.0
    %63 = vmatprep.subr.mxu0 0.0
    %64 = vmatpush1.msra.mxu0 0.0
    %65 = vmatprep.subr.mxu0 0.0
    %66 = vmatpush1.msra.mxu0 0.0
    %67 = vmatprep.subr.mxu0 0.0
    %68 = vmatpush1.msra.mxu0 0.0
    %69 = vmatprep.subr.mxu0 0.0
    %70 = vmatpush1.msra.mxu0 0.0
    %71 = vmatprep.subr.mxu0 0.0
    %72 = vmatpush1.msra.mxu0 0.0
    %73 = vmatprep.subr.mxu0 0.0
    %74 = vmatpush1.msra.mxu0 0.0
    %75 = vmatprep.subr.mxu0 0.0
    %76 = vmatpush1.msra.mxu0 0.0
    %77 = vmatprep.subr.mxu0 0.0
    %78 = vmatpush1.msra.mxu0 0.0
    %79 = vmatprep.subr.mxu0 0.0
    %80 = vmatpush1.msra.mxu0 0.0
    %81 = vmatprep.subr.mxu0 0.0
    %82 = vmatpush1.msra.mxu0 0.0
    %83 = vmatprep.subr.mxu0 0.0
    %84 = vmatpush1.msra.mxu0 0.0
    %85 = vmatprep.mubr.f32.mxu0 0.0
    %86 = vmatmul.mubr.f32.gmra.mrb[0].mxu0 %v19
    %v87 = vpop.f32.mrb[0].mxu0
    %v88 = vadd.f32 0.0, %v87
    %v89 = vpop.f32.mrb[0].mxu0
    %90 = vdwg.mxu0
    %vm91 = vcmask 130048
    %v92 = vsel %vm91, %v88, -inf
    %93 = vmax.xlane.f32.xlu0 %v92
    %v94 = vpop.xlane.xlu0 %93
    %v95 = vsub.f32 %v88, %v94
    %v96 = vmul.f32 %v95, 1.442695
    %v97 = vpow.pop %v96
    %v98 = vsel %vm91, %v97, 0.0
    %99 = vadd.xlane.f32.xlu0 %v98
    %v100 = vpop.xlane.xlu0 %99
    %v101 = vrcp.pop %v100
    %v102 = vmul.f32 %v97, %v101
    %103 = vst.msk [vmem:[#allocation2] sm:$0xff] %vm91, %v102
    // Predicated region
    $region10: #{tpu_custom_call.1} parent=1 // pred_check
      _
    $region11: #{tpu_custom_call.1} parent=1 // pred_check_branch
      %105 = sbr.rel (0) target = $region13
    $region12: #{tpu_custom_call.1} parent=1 // pred_region
      %s107 = ssub.s32 128, 128
      %108 = vsyncadd [#allocation3], %s107
      %s110 = sshll.u32 [#allocation2], 4
      %s111 = int_to_ptr.vmem [resolvable:$true] %s110
      %113 = dma.vmem_to_hbm [thread:$0]  %s111, 128, %s2, [#allocation3]
    $region13: #{tpu_custom_call.1} parent=1 // pred_fallthru
      _
    // Predicated region
    $region14: #{tpu_custom_call.1} parent=1 // pred_check
      _
    $region15: #{tpu_custom_call.1} parent=1 // pred_check_branch
      %115 = sbr.rel (0) target = $region17
    $region16: #{tpu_custom_call.1} parent=1 // pred_region
      %116 = dma.done [#allocation3], 128
    $region17: #{tpu_custom_call.1} parent=1 // pred_fallthru
      _
    %117 = vsyncpa [#allocation3], 1

</llo_original>
